<compile_context>
chip_gen: v5e
topology: v5e:2x2
jax: 0.10.0
libtpu: 0.0.40
codegen_flags: <defaults>
</compile_context>

<pallas_src>
import jax
import jax.numpy as jnp
from jax.experimental import pallas as pl
from jax.experimental.pallas import tpu as pltpu

LANE = 128      # lane width (last dim)
SUBLANE = 8     # f32 sublane width (second-to-last dim)
MAX_TILE_B = 256


def _round_up(x, m):
    return ((x + m - 1) // m) * m


def _pad2d(a, rows, cols):
    return jnp.pad(a, ((0, rows - a.shape[0]), (0, cols - a.shape[1])))


def _qnetwork_kernel(x_ref,
                     w1_ref, b1_ref,
                     w2_ref, b2_ref,
                     w3_ref, b3_ref,
                     w4_ref, b4_ref,
                     out_ref):
    x = x_ref[...]
    # fc1 + relu
    h = jnp.dot(x, w1_ref[...], preferred_element_type=jnp.float32) + b1_ref[...]
    h = jnp.maximum(h, 0.0)
    # fc2 + relu
    h = jnp.dot(h, w2_ref[...], preferred_element_type=jnp.float32) + b2_ref[...]
    h = jnp.maximum(h, 0.0)
    # fc3 + relu
    h = jnp.dot(h, w3_ref[...], preferred_element_type=jnp.float32) + b3_ref[...]
    h = jnp.maximum(h, 0.0)
    # fc4 (no activation)
    q = jnp.dot(h, w4_ref[...], preferred_element_type=jnp.float32) + b4_ref[...]
    out_ref[...] = q.astype(out_ref.dtype)


def _full_block(shape):
    # Constant index map: operand is DMA'd once and stays VMEM-resident
    # across the whole batch grid.
    return pl.BlockSpec(shape, lambda i: (0,) * len(shape))


def qnetwork_forward(state, params):
    """QNetwork forward pass via one pallas_call.

    state:  (B, state_size) float32
    params: dict with w1..w4 of shape (in, out) and b1..b4 of shape (1, out)
            (weights pre-transposed vs. PyTorch's (out, in) layout)
    returns (B, action_size) float32
    """
    B, state_size = state.shape
    h1 = params["w1"].shape[1]
    h2 = params["w2"].shape[1]
    h3 = params["w3"].shape[1]
    action_size = params["w4"].shape[1]

    # Lane-dense padded dims (multiples of 128); padded entries are zero so
    # the math is unchanged (zero weight rows/cols, relu(0)=0).
    in_p = _round_up(state_size, LANE)
    h1_p = _round_up(h1, LANE)
    h2_p = _round_up(h2, LANE)
    h3_p = _round_up(h3, LANE)
    out_p = _round_up(action_size, LANE)

    # Batch tiling: multiple of 8 sublanes, capped for VMEM headroom (v7x).
    tile_b = min(MAX_TILE_B, _round_up(B, SUBLANE))
    b_pad = _round_up(B, tile_b)
    grid = (pl.cdiv(b_pad, tile_b),)

    x_p = _pad2d(state, b_pad, in_p)
    w1 = _pad2d(params["w1"], in_p, h1_p)
    b1 = _pad2d(params["b1"], 1, h1_p)
    w2 = _pad2d(params["w2"], h1_p, h2_p)
    b2 = _pad2d(params["b2"], 1, h2_p)
    w3 = _pad2d(params["w3"], h2_p, h3_p)
    b3 = _pad2d(params["b3"], 1, h3_p)
    w4 = _pad2d(params["w4"], h3_p, out_p)
    b4 = _pad2d(params["b4"], 1, out_p)

    out_padded = pl.pallas_call(
        _qnetwork_kernel,
        out_shape=jax.ShapeDtypeStruct((b_pad, out_p), jnp.float32),
        grid=grid,
        in_specs=[
            pl.BlockSpec((tile_b, in_p), lambda i: (i, 0)),   # x: tiled over batch
            _full_block(w1.shape), _full_block(b1.shape),
            _full_block(w2.shape), _full_block(b2.shape),
            _full_block(w3.shape), _full_block(b3.shape),
            _full_block(w4.shape), _full_block(b4.shape),
        ],
        out_specs=pl.BlockSpec((tile_b, out_p), lambda i: (i, 0)),
        compiler_params=pltpu.CompilerParams(
            dimension_semantics=("parallel",)),
    )(x_p, w1, b1, w2, b2, w3, b3, w4, b4)

    return out_padded[:B, :action_size]


def init_qnetwork_params(key, state_size, action_size,
                         fc1_units=64, fc2_units=64, fc3_units=64):
    """Init mimicking PyTorch nn.Linear default:
    U(-1/sqrt(fan_in), 1/sqrt(fan_in)) for both W and b.
    Weights stored as (in, out) (transposed vs. PyTorch)."""
    dims = [(state_size, fc1_units),
            (fc1_units, fc2_units),
            (fc2_units, fc3_units),
            (fc3_units, action_size)]
    params = {}
    for i, (fan_in, fan_out) in enumerate(dims, start=1):
        key, kw, kb = jax.random.split(key, 3)
        bound = 1.0 / jnp.sqrt(jnp.float32(fan_in))
        params[f"w{i}"] = jax.random.uniform(
            kw, (fan_in, fan_out), jnp.float32, minval=-bound, maxval=bound)
        params[f"b{i}"] = jax.random.uniform(
            kb, (1, fan_out), jnp.float32, minval=-bound, maxval=bound)
    return params


def qnetwork_reference(state, params):
    """Pure-JAX reference of the same forward pass."""
    h = jnp.maximum(state @ params["w1"] + params["b1"], 0.0)
    h = jnp.maximum(h @ params["w2"] + params["b2"], 0.0)
    h = jnp.maximum(h @ params["w3"] + params["b3"], 0.0)
    return h @ params["w4"] + params["b4"]


if __name__ == "__main__":
    key = jax.random.PRNGKey(0)

    batch = 8
    state_size = 8
    action_size = 4

    key, k_params, k_state = jax.random.split(key, 3)
    params = init_qnetwork_params(k_params, state_size, action_size)
    state = jax.random.normal(k_state, (batch, state_size), jnp.float32)

    # Small-batch check (single grid step).
    q_kernel = qnetwork_forward(state, params)
    jax.block_until_ready(q_kernel)
    q_ref = qnetwork_reference(state, params)
    assert q_kernel.shape == (batch, action_size)
    assert jnp.allclose(q_kernel, q_ref, atol=1e-4, rtol=1e-4), "mismatch vs reference (small batch)"

    # Larger batch check (exercises multi-step batch grid + batch padding).
    key, k_big = jax.random.split(key)
    big_state = jax.random.normal(k_big, (300, state_size), jnp.float32)
    q_big = qnetwork_forward(big_state, params)
    jax.block_until_ready(q_big)
    q_big_ref = qnetwork_reference(big_state, params)
    assert q_big.shape == (300, action_size)
    assert jnp.allclose(q_big, q_big_ref, atol=1e-4, rtol=1e-4), "mismatch vs reference (large batch)"

    print("KERNEL_OK")
</pallas_src>

<mosaic_0001>
module attributes {stable_mosaic.version = 11 : i64} {
  func.func @_qnetwork_kernel(%arg0: i32, %arg1: memref<8x128xf32, #tpu.memory_space<vmem>>, %arg2: memref<128x128xf32, #tpu.memory_space<vmem>>, %arg3: memref<1x128xf32, #tpu.memory_space<vmem>>, %arg4: memref<128x128xf32, #tpu.memory_space<vmem>>, %arg5: memref<1x128xf32, #tpu.memory_space<vmem>>, %arg6: memref<128x128xf32, #tpu.memory_space<vmem>>, %arg7: memref<1x128xf32, #tpu.memory_space<vmem>>, %arg8: memref<128x128xf32, #tpu.memory_space<vmem>>, %arg9: memref<1x128xf32, #tpu.memory_space<vmem>>, %arg10: memref<8x128xf32, #tpu.memory_space<vmem>>) attributes {dimension_semantics = [#tpu.dimension_semantics<parallel>], iteration_bounds = array<i64: 1>, scalar_prefetch = 0 : i64, scratch_operands = 0 : i64, tpu.core_type = #tpu.core_type<tc>, window_params = [{transform_indices = @transform_0, window_bounds = array<i64: 8, 128>}, {pipeline_mode = #tpu.pipeline_mode<synchronous>, transform_indices = @transform_1, window_bounds = array<i64: 128, 128>}, {pipeline_mode = #tpu.pipeline_mode<synchronous>, transform_indices = @transform_2, window_bounds = array<i64: 1, 128>}, {pipeline_mode = #tpu.pipeline_mode<synchronous>, transform_indices = @transform_3, window_bounds = array<i64: 128, 128>}, {pipeline_mode = #tpu.pipeline_mode<synchronous>, transform_indices = @transform_4, window_bounds = array<i64: 1, 128>}, {pipeline_mode = #tpu.pipeline_mode<synchronous>, transform_indices = @transform_5, window_bounds = array<i64: 128, 128>}, {pipeline_mode = #tpu.pipeline_mode<synchronous>, transform_indices = @transform_6, window_bounds = array<i64: 1, 128>}, {pipeline_mode = #tpu.pipeline_mode<synchronous>, transform_indices = @transform_7, window_bounds = array<i64: 128, 128>}, {pipeline_mode = #tpu.pipeline_mode<synchronous>, transform_indices = @transform_8, window_bounds = array<i64: 1, 128>}, {transform_indices = @transform_9, window_bounds = array<i64: 8, 128>}]} {
    %c0 = arith.constant 0 : index
    %c0_0 = arith.constant 0 : index
    %0 = vector.load %arg1[%c0, %c0_0] : memref<8x128xf32, #tpu.memory_space<vmem>>, vector<8x128xf32>
    %c0_1 = arith.constant 0 : index
    %c0_2 = arith.constant 0 : index
    %1 = vector.load %arg2[%c0_1, %c0_2] : memref<128x128xf32, #tpu.memory_space<vmem>>, vector<128x128xf32>
    %cst = arith.constant dense<0.000000e+00> : vector<8x128xf32>
    %2 = tpu.matmul %0, %1, %cst {dimension_numbers = #tpu.dot_dimension_numbers<[1], [0], [0], [1], [0, 0, 1, 1], [], []>} : vector<8x128xf32>, vector<128x128xf32>, vector<8x128xf32> -> vector<8x128xf32>
    %c0_3 = arith.constant 0 : index
    %c0_4 = arith.constant 0 : index
    %3 = vector.load %arg3[%c0_3, %c0_4] : memref<1x128xf32, #tpu.memory_space<vmem>>, vector<1x128xf32>
    %4 = vector.broadcast %3 : vector<1x128xf32> to vector<8x128xf32>
    %5 = arith.addf %2, %4 : vector<8x128xf32>
    %cst_5 = arith.constant 0.000000e+00 : f32
    %6 = vector.broadcast %cst_5 : f32 to vector<8x128xf32>
    %7 = arith.maximumf %5, %6 : vector<8x128xf32>
    %c0_6 = arith.constant 0 : index
    %c0_7 = arith.constant 0 : index
    %8 = vector.load %arg4[%c0_6, %c0_7] : memref<128x128xf32, #tpu.memory_space<vmem>>, vector<128x128xf32>
    %cst_8 = arith.constant dense<0.000000e+00> : vector<8x128xf32>
    %9 = tpu.matmul %7, %8, %cst_8 {dimension_numbers = #tpu.dot_dimension_numbers<[1], [0], [0], [1], [0, 0, 1, 1], [], []>} : vector<8x128xf32>, vector<128x128xf32>, vector<8x128xf32> -> vector<8x128xf32>
    %c0_9 = arith.constant 0 : index
    %c0_10 = arith.constant 0 : index
    %10 = vector.load %arg5[%c0_9, %c0_10] : memref<1x128xf32, #tpu.memory_space<vmem>>, vector<1x128xf32>
    %11 = vector.broadcast %10 : vector<1x128xf32> to vector<8x128xf32>
    %12 = arith.addf %9, %11 : vector<8x128xf32>
    %cst_11 = arith.constant 0.000000e+00 : f32
    %13 = vector.broadcast %cst_11 : f32 to vector<8x128xf32>
    %14 = arith.maximumf %12, %13 : vector<8x128xf32>
    %c0_12 = arith.constant 0 : index
    %c0_13 = arith.constant 0 : index
    %15 = vector.load %arg6[%c0_12, %c0_13] : memref<128x128xf32, #tpu.memory_space<vmem>>, vector<128x128xf32>
    %cst_14 = arith.constant dense<0.000000e+00> : vector<8x128xf32>
    %16 = tpu.matmul %14, %15, %cst_14 {dimension_numbers = #tpu.dot_dimension_numbers<[1], [0], [0], [1], [0, 0, 1, 1], [], []>} : vector<8x128xf32>, vector<128x128xf32>, vector<8x128xf32> -> vector<8x128xf32>
    %c0_15 = arith.constant 0 : index
    %c0_16 = arith.constant 0 : index
    %17 = vector.load %arg7[%c0_15, %c0_16] : memref<1x128xf32, #tpu.memory_space<vmem>>, vector<1x128xf32>
    %18 = vector.broadcast %17 : vector<1x128xf32> to vector<8x128xf32>
    %19 = arith.addf %16, %18 : vector<8x128xf32>
    %cst_17 = arith.constant 0.000000e+00 : f32
    %20 = vector.broadcast %cst_17 : f32 to vector<8x128xf32>
    %21 = arith.maximumf %19, %20 : vector<8x128xf32>
    %c0_18 = arith.constant 0 : index
    %c0_19 = arith.constant 0 : index
    %22 = vector.load %arg8[%c0_18, %c0_19] : memref<128x128xf32, #tpu.memory_space<vmem>>, vector<128x128xf32>
    %cst_20 = arith.constant dense<0.000000e+00> : vector<8x128xf32>
    %23 = tpu.matmul %21, %22, %cst_20 {dimension_numbers = #tpu.dot_dimension_numbers<[1], [0], [0], [1], [0, 0, 1, 1], [], []>} : vector<8x128xf32>, vector<128x128xf32>, vector<8x128xf32> -> vector<8x128xf32>
    %c0_21 = arith.constant 0 : index
    %c0_22 = arith.constant 0 : index
    %24 = vector.load %arg9[%c0_21, %c0_22] : memref<1x128xf32, #tpu.memory_space<vmem>>, vector<1x128xf32>
    %25 = vector.broadcast %24 : vector<1x128xf32> to vector<8x128xf32>
    %26 = arith.addf %23, %25 : vector<8x128xf32>
    %c0_23 = arith.constant 0 : index
    %c0_24 = arith.constant 0 : index
    %27 = vector.load %arg10[%c0_23, %c0_24] : memref<8x128xf32, #tpu.memory_space<vmem>>, vector<8x128xf32>
    tpu.vector_store %arg10[%c0_23, %c0_24], %26 {strides = array<i32>} : memref<8x128xf32, #tpu.memory_space<vmem>>, vector<8x128xf32>,
    return
  }
  func.func @transform_0(%arg0: i32) -> (i32, i32) {
    %c0_i32 = arith.constant 0 : i32
    %c0_i32_0 = arith.constant 0 : i32
    return %arg0, %c0_i32 : i32, i32
  }
  func.func @transform_1(%arg0: i32) -> (i32, i32) {
    %c0_i32 = arith.constant 0 : i32
    %c0_i32_0 = arith.constant 0 : i32
    %c0_i32_1 = arith.constant 0 : i32
    return %c0_i32, %c0_i32_0 : i32, i32
  }
  func.func @transform_2(%arg0: i32) -> (i32, i32) {
    %c0_i32 = arith.constant 0 : i32
    %c0_i32_0 = arith.constant 0 : i32
    %c0_i32_1 = arith.constant 0 : i32
    return %c0_i32, %c0_i32_0 : i32, i32
  }
  func.func @transform_3(%arg0: i32) -> (i32, i32) {
    %c0_i32 = arith.constant 0 : i32
    %c0_i32_0 = arith.constant 0 : i32
    %c0_i32_1 = arith.constant 0 : i32
    return %c0_i32, %c0_i32_0 : i32, i32
  }
  func.func @transform_4(%arg0: i32) -> (i32, i32) {
    %c0_i32 = arith.constant 0 : i32
    %c0_i32_0 = arith.constant 0 : i32
    %c0_i32_1 = arith.constant 0 : i32
    return %c0_i32, %c0_i32_0 : i32, i32
  }
  func.func @transform_5(%arg0: i32) -> (i32, i32) {
    %c0_i32 = arith.constant 0 : i32
    %c0_i32_0 = arith.constant 0 : i32
    %c0_i32_1 = arith.constant 0 : i32
    return %c0_i32, %c0_i32_0 : i32, i32
  }
  func.func @transform_6(%arg0: i32) -> (i32, i32) {
    %c0_i32 = arith.constant 0 : i32
    %c0_i32_0 = arith.constant 0 : i32
    %c0_i32_1 = arith.constant 0 : i32
    return %c0_i32, %c0_i32_0 : i32, i32
  }
  func.func @transform_7(%arg0: i32) -> (i32, i32) {
    %c0_i32 = arith.constant 0 : i32
    %c0_i32_0 = arith.constant 0 : i32
    %c0_i32_1 = arith.constant 0 : i32
    return %c0_i32, %c0_i32_0 : i32, i32
  }
  func.func @transform_8(%arg0: i32) -> (i32, i32) {
    %c0_i32 = arith.constant 0 : i32
    %c0_i32_0 = arith.constant 0 : i32
    %c0_i32_1 = arith.constant 0 : i32
    return %c0_i32, %c0_i32_0 : i32, i32
  }
  func.func @transform_9(%arg0: i32) -> (i32, i32) {
    %c0_i32 = arith.constant 0 : i32
    %c0_i32_0 = arith.constant 0 : i32
    return %arg0, %c0_i32 : i32, i32
  }
}

</mosaic_0001>

<llo_original>
// kernel: tpu_custom_call.1
$region0: #{tpu_custom_call.1}
  #allocation0 [shape = 'u32[]', space=smem, size = 0x4, offset = 0x4, fixed_abs, tag = 'smem constant byte address 0x4 - core index']
  #allocation1 [shape = 'u32[72,128]{1,0:T(1,128)}', space=vmem, size = 0x9000, scoped, tag = 'internal scratch']
  %s0 = inlined_call_operand.hbm [shape: f32[8,128], index: 0, kind: input, shape index: {}]
  %s1 = inlined_call_operand.hbm [shape: f32[128,128], index: 1, kind: input, shape index: {}]
  %s2 = inlined_call_operand.vmem [shape: f32[1,128], index: 2, kind: input, shape index: {}]
  %s3 = inlined_call_operand.hbm [shape: f32[128,128], index: 3, kind: input, shape index: {}]
  %s4 = inlined_call_operand.vmem [shape: f32[1,128], index: 4, kind: input, shape index: {}]
  %s5 = inlined_call_operand.hbm [shape: f32[128,128], index: 5, kind: input, shape index: {}]
  %s6 = inlined_call_operand.vmem [shape: f32[1,128], index: 6, kind: input, shape index: {}]
  %s7 = inlined_call_operand.hbm [shape: f32[128,128], index: 7, kind: input, shape index: {}]
  %s8 = inlined_call_operand.vmem [shape: f32[1,128], index: 8, kind: input, shape index: {}]
  %s9 = inlined_call_operand.hbm [shape: f32[8,128], index: 9, kind: output, shape index: {}]
  %s10 = sld [smem:[#allocation0]]
  $region66: #{tpu_custom_call.1} parent=0
    _
  %s12 = ssub.s32 1, %s10
  %s13 = scalar_select 0, %s12, %s10
  $region1: #{tpu_custom_call.1} parent=0
    #allocation2 [shape = 'u8[4096]{0}', space=vmem, size = 0x1000, scoped, tag = 'input window, operand 0, single buffered']
    #allocation3 [shape = 's32[1]{0}', space=sflag, size = 0x4, scoped, tag = 'scoped memory for tpu_custom_call.1']
    #allocation4 [shape = 's32[1]{0}', space=sflag, size = 0x4, scoped, tag = 'scoped memory for tpu_custom_call.1']
    #allocation5 [shape = 'u8[65536]{0}', space=vmem, size = 0x10000, scoped, tag = 'input window, operand 1, single buffered']
    #allocation6 [shape = 's32[1]{0}', space=sflag, size = 0x4, scoped, tag = 'scoped memory for tpu_custom_call.1']
    #allocation7 [shape = 'u8[65536]{0}', space=vmem, size = 0x10000, scoped, tag = 'input window, operand 3, single buffered']
    #allocation8 [shape = 'u8[65536]{0}', space=vmem, size = 0x10000, scoped, tag = 'input window, operand 5, single buffered']
    #allocation9 [shape = 's32[1]{0}', space=sflag, size = 0x4, scoped, tag = 'scoped memory for tpu_custom_call.1']
    #allocation10 [shape = 'u8[65536]{0}', space=vmem, size = 0x10000, scoped, tag = 'input window, operand 7, single buffered']
    #allocation11 [shape = 'u8[4096]{0}', space=vmem, size = 0x1000, scoped, tag = 'output window, operand 0, single buffered']
    %14 = vsyncpa [#allocation3], 0
    %15 = vsyncpa [#allocation6], 0
    %16 = vsyncpa [#allocation9], 0
    %17 = vsyncpa [#allocation4], 0
    // Predicated region
    $region2: #{tpu_custom_call.1} parent=1 // pred_check
      _
    $region3: #{tpu_custom_call.1} parent=1 // pred_check_branch
      %19 = sbr.rel (0) target = $region5
    $region4: #{tpu_custom_call.1} parent=1 // pred_region
      %21 = vsyncadd [#allocation3], 0
      %s23 = sshll.u32 %s0, 4
      %s24 = int_to_ptr.hbm [resolvable:$true] %s23
      %s25 = sshll.u32 [#allocation2], 4
      %s26 = int_to_ptr.vmem [resolvable:$true] %s25
      %28 = dma.hbm_to_vmem [thread:$0]  %s24, 128, %s26, [#allocation3]
    $region5: #{tpu_custom_call.1} parent=1 // pred_fallthru
      _
    // Predicated region
    $region6: #{tpu_custom_call.1} parent=1 // pred_check
      _
    $region7: #{tpu_custom_call.1} parent=1 // pred_check_branch
      %30 = sbr.rel (0) target = $region9
    $region8: #{tpu_custom_call.1} parent=1 // pred_region
      %32 = vsyncadd [#allocation6], 0
      %s33 = sshll.u32 %s1, 4
      %s34 = int_to_ptr.hbm [resolvable:$true] %s33
      %s35 = sshll.u32 [#allocation5], 4
      %s36 = int_to_ptr.vmem [resolvable:$true] %s35
      %41 = dma.hbm_to_vmem [thread:$0]  %s34, 2048, %s36, [#allocation6], 128, 128, 8
    $region9: #{tpu_custom_call.1} parent=1 // pred_fallthru
      _
    // Predicated region
    $region10: #{tpu_custom_call.1} parent=1 // pred_check
      _
    $region11: #{tpu_custom_call.1} parent=1 // pred_check_branch
      %43 = sbr.rel (0) target = $region13
    $region12: #{tpu_custom_call.1} parent=1 // pred_region
      _
    $region13: #{tpu_custom_call.1} parent=1 // pred_fallthru
      _
    // Predicated region
    $region14: #{tpu_custom_call.1} parent=1 // pred_check
      _
    $region15: #{tpu_custom_call.1} parent=1 // pred_check_branch
      %45 = sbr.rel (0) target = $region17
    $region16: #{tpu_custom_call.1} parent=1 // pred_region
      %47 = vsyncadd [#allocation6], 0
      %s48 = sshll.u32 %s3, 4
      %s49 = int_to_ptr.hbm [resolvable:$true] %s48
      %s50 = sshll.u32 [#allocation7], 4
      %s51 = int_to_ptr.vmem [resolvable:$true] %s50
      %56 = dma.hbm_to_vmem [thread:$0]  %s49, 2048, %s51, [#allocation6], 128, 128, 8
    $region17: #{tpu_custom_call.1} parent=1 // pred_fallthru
      _
    // Predicated region
    $region18: #{tpu_custom_call.1} parent=1 // pred_check
      _
    $region19: #{tpu_custom_call.1} parent=1 // pred_check_branch
      %58 = sbr.rel (0) target = $region21
    $region20: #{tpu_custom_call.1} parent=1 // pred_region
      _
    $region21: #{tpu_custom_call.1} parent=1 // pred_fallthru
      _
    // Predicated region
    $region22: #{tpu_custom_call.1} parent=1 // pred_check
      _
    $region23: #{tpu_custom_call.1} parent=1 // pred_check_branch
      %60 = sbr.rel (0) target = $region25
    $region24: #{tpu_custom_call.1} parent=1 // pred_region
      %62 = vsyncadd [#allocation9], 0
      %s63 = sshll.u32 %s5, 4
      %s64 = int_to_ptr.hbm [resolvable:$true] %s63
      %s65 = sshll.u32 [#allocation8], 4
      %s66 = int_to_ptr.vmem [resolvable:$true] %s65
      %71 = dma.hbm_to_vmem [thread:$0]  %s64, 2048, %s66, [#allocation9], 128, 128, 8
    $region25: #{tpu_custom_call.1} parent=1 // pred_fallthru
      _
    // Predicated region
    $region26: #{tpu_custom_call.1} parent=1 // pred_check
      _
    $region27: #{tpu_custom_call.1} parent=1 // pred_check_branch
      %73 = sbr.rel (0) target = $region29
    $region28: #{tpu_custom_call.1} parent=1 // pred_region
      _
    $region29: #{tpu_custom_call.1} parent=1 // pred_fallthru
      _
    // Predicated region
    $region30: #{tpu_custom_call.1} parent=1 // pred_check
      _
    $region31: #{tpu_custom_call.1} parent=1 // pred_check_branch
      %75 = sbr.rel (0) target = $region33
    $region32: #{tpu_custom_call.1} parent=1 // pred_region
      %77 = vsyncadd [#allocation9], 0
      %s78 = sshll.u32 %s7, 4
      %s79 = int_to_ptr.hbm [resolvable:$true] %s78
      %s80 = sshll.u32 [#allocation10], 4
      %s81 = int_to_ptr.vmem [resolvable:$true] %s80
      %86 = dma.hbm_to_vmem [thread:$0]  %s79, 2048, %s81, [#allocation9], 128, 128, 8
    $region33: #{tpu_custom_call.1} parent=1 // pred_fallthru
      _
    // Predicated region
    $region34: #{tpu_custom_call.1} parent=1 // pred_check
      _
    $region35: #{tpu_custom_call.1} parent=1 // pred_check_branch
      %88 = sbr.rel (0) target = $region37
    $region36: #{tpu_custom_call.1} parent=1 // pred_region
      _
    $region37: #{tpu_custom_call.1} parent=1 // pred_fallthru
      _
    // Predicated region
    $region38: #{tpu_custom_call.1} parent=1 // pred_check
      _
    $region39: #{tpu_custom_call.1} parent=1 // pred_check_branch
      %90 = sbr.rel (0) target = $region41
    $region40: #{tpu_custom_call.1} parent=1 // pred_region
      %92 = dma.done [#allocation3], 128
    $region41: #{tpu_custom_call.1} parent=1 // pred_fallthru
      _
    // Predicated region
    $region42: #{tpu_custom_call.1} parent=1 // pred_check
      _
    $region43: #{tpu_custom_call.1} parent=1 // pred_check_branch
      %94 = sbr.rel (0) target = $region45
    $region44: #{tpu_custom_call.1} parent=1 // pred_region
      %96 = dma.done [#allocation6], 2048
    $region45: #{tpu_custom_call.1} parent=1 // pred_fallthru
      _
    // Predicated region
    $region46: #{tpu_custom_call.1} parent=1 // pred_check
      _
    $region47: #{tpu_custom_call.1} parent=1 // pred_check_branch
      %98 = sbr.rel (0) target = $region49
    $region48: #{tpu_custom_call.1} parent=1 // pred_region
      %100 = dma.done [#allocation6], 2048
    $region49: #{tpu_custom_call.1} parent=1 // pred_fallthru
      _
    // Predicated region
    $region50: #{tpu_custom_call.1} parent=1 // pred_check
      _
    $region51: #{tpu_custom_call.1} parent=1 // pred_check_branch
      %102 = sbr.rel (0) target = $region53
    $region52: #{tpu_custom_call.1} parent=1 // pred_region
      %104 = dma.done [#allocation9], 2048
    $region53: #{tpu_custom_call.1} parent=1 // pred_fallthru
      _
    // Predicated region
    $region54: #{tpu_custom_call.1} parent=1 // pred_check
      _
    $region55: #{tpu_custom_call.1} parent=1 // pred_check_branch
      %106 = sbr.rel (0) target = $region57
    $region56: #{tpu_custom_call.1} parent=1 // pred_region
      %108 = dma.done [#allocation9], 2048
    $region57: #{tpu_custom_call.1} parent=1 // pred_fallthru
      _
    %v109 = vld [vmem:[#allocation2] sm:$0xff]
    %v110 = vld [vmem:[#allocation5] sm:$0xff]
    %v111 = vld [vmem:[#allocation5 + $0x8] sm:$0xff]
    %v112 = vld [vmem:[#allocation5 + $0x10] sm:$0xff]
    %v113 = vld [vmem:[#allocation5 + $0x18] sm:$0xff]
    %v114 = vld [vmem:[#allocation5 + $0x20] sm:$0xff]
    %v115 = vld [vmem:[#allocation5 + $0x28] sm:$0xff]
    %v116 = vld [vmem:[#allocation5 + $0x30] sm:$0xff]
    %v117 = vld [vmem:[#allocation5 + $0x38] sm:$0xff]
    %v118 = vld [vmem:[#allocation5 + $0x40] sm:$0xff]
    %v119 = vld [vmem:[#allocation5 + $0x48] sm:$0xff]
    %v120 = vld [vmem:[#allocation5 + $0x50] sm:$0xff]
    %v121 = vld [vmem:[#allocation5 + $0x58] sm:$0xff]
    %v122 = vld [vmem:[#allocation5 + $0x60] sm:$0xff]
    %v123 = vld [vmem:[#allocation5 + $0x68] sm:$0xff]
    %v124 = vld [vmem:[#allocation5 + $0x70] sm:$0xff]
    %v125 = vld [vmem:[#allocation5 + $0x78] sm:$0xff]
    %v126 = vld [vmem:[%s2] sm:$0x1]
    %v128 = vperm.slane %v126, 0
    %130 = vmatpush.msra.mxu0 %v125
    %131 = vmatpush.msra.mxu0 %v124
    %132 = vmatpush.msra.mxu0 %v123
    %133 = vmatpush.msra.mxu0 %v122
    %134 = vmatpush.msra.mxu0 %v121
    %135 = vmatpush.msra.mxu0 %v120
    %136 = vmatpush.msra.mxu0 %v119
    %137 = vmatpush.msra.mxu0 %v118
    %138 = vmatpush.msra.mxu0 %v117
    %139 = vmatpush.msra.mxu0 %v116
    %140 = vmatpush.msra.mxu0 %v115
    %141 = vmatpush.msra.mxu0 %v114
    %142 = vmatpush.msra.mxu0 %v113
    %143 = vmatpush.msra.mxu0 %v112
    %144 = vmatpush.msra.mxu0 %v111
    %145 = vmatpush.msra.mxu0 %v110
    %146 = vmatmul.f32.gmra.mxu0 %v109
    %v147 = vpop.f32.mrf.mxu0
    %v148 = vadd.f32 %v128, %v147
    %149 = vdwg.mxu0
    %v150 = vmax.f32 %v148, 0.0
    %v151 = vld [vmem:[#allocation7] sm:$0xff]
    %v152 = vld [vmem:[#allocation7 + $0x8] sm:$0xff]
    %v153 = vld [vmem:[#allocation7 + $0x10] sm:$0xff]
    %v154 = vld [vmem:[#allocation7 + $0x18] sm:$0xff]
    %v155 = vld [vmem:[#allocation7 + $0x20] sm:$0xff]
    %v156 = vld [vmem:[#allocation7 + $0x28] sm:$0xff]
    %v157 = vld [vmem:[#allocation7 + $0x30] sm:$0xff]
    %v158 = vld [vmem:[#allocation7 + $0x38] sm:$0xff]
    %v159 = vld [vmem:[#allocation7 + $0x40] sm:$0xff]
    %v160 = vld [vmem:[#allocation7 + $0x48] sm:$0xff]
    %v161 = vld [vmem:[#allocation7 + $0x50] sm:$0xff]
    %v162 = vld [vmem:[#allocation7 + $0x58] sm:$0xff]
    %v163 = vld [vmem:[#allocation7 + $0x60] sm:$0xff]
    %v164 = vld [vmem:[#allocation7 + $0x68] sm:$0xff]
    %v165 = vld [vmem:[#allocation7 + $0x70] sm:$0xff]
    %v166 = vld [vmem:[#allocation7 + $0x78] sm:$0xff]
    %v167 = vld [vmem:[%s4] sm:$0x1]
    %v169 = vperm.slane %v167, 0
    %171 = vmatpush.msra.mxu0 %v166
    %172 = vmatpush.msra.mxu0 %v165
    %173 = vmatpush.msra.mxu0 %v164
    %174 = vmatpush.msra.mxu0 %v163
    %175 = vmatpush.msra.mxu0 %v162
    %176 = vmatpush.msra.mxu0 %v161
    %177 = vmatpush.msra.mxu0 %v160
    %178 = vmatpush.msra.mxu0 %v159
    %179 = vmatpush.msra.mxu0 %v158
    %180 = vmatpush.msra.mxu0 %v157
    %181 = vmatpush.msra.mxu0 %v156
    %182 = vmatpush.msra.mxu0 %v155
    %183 = vmatpush.msra.mxu0 %v154
    %184 = vmatpush.msra.mxu0 %v153
    %185 = vmatpush.msra.mxu0 %v152
    %186 = vmatpush.msra.mxu0 %v151
    %187 = vmatmul.f32.gmra.mxu0 %v150
    %v188 = vpop.f32.mrf.mxu0
    %v189 = vadd.f32 %v169, %v188
    %190 = vdwg.mxu0
    %v191 = vmax.f32 %v189, 0.0
    %v192 = vld [vmem:[#allocation8] sm:$0xff]
    %v193 = vld [vmem:[#allocation8 + $0x8] sm:$0xff]
    %v194 = vld [vmem:[#allocation8 + $0x10] sm:$0xff]
    %v195 = vld [vmem:[#allocation8 + $0x18] sm:$0xff]
    %v196 = vld [vmem:[#allocation8 + $0x20] sm:$0xff]
    %v197 = vld [vmem:[#allocation8 + $0x28] sm:$0xff]
    %v198 = vld [vmem:[#allocation8 + $0x30] sm:$0xff]
    %v199 = vld [vmem:[#allocation8 + $0x38] sm:$0xff]
    %v200 = vld [vmem:[#allocation8 + $0x40] sm:$0xff]
    %v201 = vld [vmem:[#allocation8 + $0x48] sm:$0xff]
    %v202 = vld [vmem:[#allocation8 + $0x50] sm:$0xff]
    %v203 = vld [vmem:[#allocation8 + $0x58] sm:$0xff]
    %v204 = vld [vmem:[#allocation8 + $0x60] sm:$0xff]
    %v205 = vld [vmem:[#allocation8 + $0x68] sm:$0xff]
    %v206 = vld [vmem:[#allocation8 + $0x70] sm:$0xff]
    %v207 = vld [vmem:[#allocation8 + $0x78] sm:$0xff]
    %v208 = vld [vmem:[%s6] sm:$0x1]
    %v210 = vperm.slane %v208, 0
    %212 = vmatpush.msra.mxu0 %v207
    %213 = vmatpush.msra.mxu0 %v206
    %214 = vmatpush.msra.mxu0 %v205
    %215 = vmatpush.msra.mxu0 %v204
    %216 = vmatpush.msra.mxu0 %v203
    %217 = vmatpush.msra.mxu0 %v202
    %218 = vmatpush.msra.mxu0 %v201
    %219 = vmatpush.msra.mxu0 %v200
    %220 = vmatpush.msra.mxu0 %v199
    %221 = vmatpush.msra.mxu0 %v198
    %222 = vmatpush.msra.mxu0 %v197
    %223 = vmatpush.msra.mxu0 %v196
    %224 = vmatpush.msra.mxu0 %v195
    %225 = vmatpush.msra.mxu0 %v194
    %226 = vmatpush.msra.mxu0 %v193
    %227 = vmatpush.msra.mxu0 %v192
    %228 = vmatmul.f32.gmra.mxu0 %v191
    %v229 = vpop.f32.mrf.mxu0
    %v230 = vadd.f32 %v210, %v229
    %231 = vdwg.mxu0
    %v232 = vmax.f32 %v230, 0.0
    %v233 = vld [vmem:[#allocation10] sm:$0xff]
    %v234 = vld [vmem:[#allocation10 + $0x8] sm:$0xff]
    %v235 = vld [vmem:[#allocation10 + $0x10] sm:$0xff]
    %v236 = vld [vmem:[#allocation10 + $0x18] sm:$0xff]
    %v237 = vld [vmem:[#allocation10 + $0x20] sm:$0xff]
    %v238 = vld [vmem:[#allocation10 + $0x28] sm:$0xff]
    %v239 = vld [vmem:[#allocation10 + $0x30] sm:$0xff]
    %v240 = vld [vmem:[#allocation10 + $0x38] sm:$0xff]
    %v241 = vld [vmem:[#allocation10 + $0x40] sm:$0xff]
    %v242 = vld [vmem:[#allocation10 + $0x48] sm:$0xff]
    %v243 = vld [vmem:[#allocation10 + $0x50] sm:$0xff]
    %v244 = vld [vmem:[#allocation10 + $0x58] sm:$0xff]
    %v245 = vld [vmem:[#allocation10 + $0x60] sm:$0xff]
    %v246 = vld [vmem:[#allocation10 + $0x68] sm:$0xff]
    %v247 = vld [vmem:[#allocation10 + $0x70] sm:$0xff]
    %v248 = vld [vmem:[#allocation10 + $0x78] sm:$0xff]
    %v249 = vld [vmem:[%s8] sm:$0x1]
    %v251 = vperm.slane %v249, 0
    %253 = vmatpush.msra.mxu0 %v248
    %254 = vmatpush.msra.mxu0 %v247
    %255 = vmatpush.msra.mxu0 %v246
    %256 = vmatpush.msra.mxu0 %v245
    %257 = vmatpush.msra.mxu0 %v244
    %258 = vmatpush.msra.mxu0 %v243
    %259 = vmatpush.msra.mxu0 %v242
    %260 = vmatpush.msra.mxu0 %v241
    %261 = vmatpush.msra.mxu0 %v240
    %262 = vmatpush.msra.mxu0 %v239
    %263 = vmatpush.msra.mxu0 %v238
    %264 = vmatpush.msra.mxu0 %v237
    %265 = vmatpush.msra.mxu0 %v236
    %266 = vmatpush.msra.mxu0 %v235
    %267 = vmatpush.msra.mxu0 %v234
    %268 = vmatpush.msra.mxu0 %v233
    %269 = vmatmul.f32.gmra.mxu0 %v232
    %v270 = vpop.f32.mrf.mxu0
    %v271 = vadd.f32 %v251, %v270
    %272 = vdwg.mxu0
    %273 = vst [vmem:[#allocation11] sm:$0xff] %v271
    // Predicated region
    $region58: #{tpu_custom_call.1} parent=1 // pred_check
      _
    $region59: #{tpu_custom_call.1} parent=1 // pred_check_branch
      %275 = sbr.rel (0) target = $region61
    $region60: #{tpu_custom_call.1} parent=1 // pred_region
      %277 = vsyncadd [#allocation4], 0
      %s279 = sshll.u32 [#allocation11], 4
      %s280 = int_to_ptr.vmem [resolvable:$true] %s279
      %s281 = sshll.u32 %s9, 4
      %s282 = int_to_ptr.hbm [resolvable:$true] %s281
      %284 = dma.vmem_to_hbm [thread:$0]  %s280, 128, %s282, [#allocation4]
    $region61: #{tpu_custom_call.1} parent=1 // pred_fallthru
      _
    // Predicated region
    $region62: #{tpu_custom_call.1} parent=1 // pred_check
      _
    $region63: #{tpu_custom_call.1} parent=1 // pred_check_branch
      %286 = sbr.rel (0) target = $region65
    $region64: #{tpu_custom_call.1} parent=1 // pred_region
      %288 = dma.done [#allocation4], 128
    $region65: #{tpu_custom_call.1} parent=1 // pred_fallthru
      _
    %289 = vsyncpa [#allocation3], 1
    %290 = vsyncpa [#allocation6], 1
    %291 = vsyncpa [#allocation9], 1
    %292 = vsyncpa [#allocation4], 1

</llo_original>
